<compile_context>
chip_gen: v5e
topology: v5e:2x2
jax: 0.10.0
libtpu: 0.0.40
codegen_flags: <defaults>
</compile_context>

<pallas_src>
import jax
import jax.numpy as jnp
from jax.experimental import pallas as pl
from jax.experimental.pallas import tpu as pltpu


def _linear_svm_kernel(x_ref, w_ref, b_ref, o_ref):
    # x_ref: (TB, D) VMEM, w_ref: (1, D) VMEM (replicated), b_ref: (1, 1) SMEM,
    # o_ref: (TB, 1) VMEM.
    x = x_ref[...].astype(jnp.float32)
    w = w_ref[...].astype(jnp.float32)
    # Lane-major multiply (VPU) + lane reduce (XLU); f32 accumulation.
    acc = jnp.sum(x * w, axis=-1, keepdims=True)
    o_ref[...] = (acc + b_ref[0, 0]).astype(o_ref.dtype)


# Per-input-buffer VMEM budget for one X tile. Double-buffering makes it ~2x
# this, which still fits v5e's 16 MiB default scoped VMEM with headroom.
_X_TILE_BUDGET_BYTES = 8 * 1024 * 1024
_MAX_TILE_ROWS = 2048  # enough rows to amortize the ~0.35 us/step grid overhead


def _pick_tile_b(batch: int, in_dims: int, itemsize: int) -> int:
    row_bytes = in_dims * itemsize
    tb = max(8, _X_TILE_BUDGET_BYTES // max(row_bytes, 1))
    tb = min(tb, _MAX_TILE_ROWS)
    if tb >= batch:
        return batch  # single full block (block dim == array dim is always legal)
    # Multiple blocks: second-to-last block dim must be a multiple of 8.
    return max(8, (tb // 8) * 8)


def linear_svm_forward(x, weight, bias):
    """x: (B, D), weight: (1, D) (PyTorch layout), bias: (1,) -> (B, 1)."""
    B, D = x.shape
    assert weight.shape == (1, D)
    b2d = bias.reshape(1, 1)

    tb = _pick_tile_b(B, D, x.dtype.itemsize)
    grid = (pl.cdiv(B, tb),)

    return pl.pallas_call(
        _linear_svm_kernel,
        out_shape=jax.ShapeDtypeStruct((B, 1), x.dtype),
        grid=grid,
        in_specs=[
            pl.BlockSpec((tb, D), lambda i: (i, 0)),     # X: tiled over batch
            pl.BlockSpec((1, D), lambda i: (0, 0)),      # weight: replicated
            pl.BlockSpec(memory_space=pltpu.SMEM),       # bias scalar
        ],
        out_specs=pl.BlockSpec((tb, 1), lambda i: (i, 0)),
        compiler_params=pltpu.CompilerParams(
            dimension_semantics=("parallel",),           # shard batch over TCs (v7x)
            vmem_limit_bytes=32 * 1024 * 1024,
        ),
    )(x, weight, b2d)


if __name__ == "__main__":
    key = jax.random.PRNGKey(0)
    k_x, k_w, k_b, k_x2 = jax.random.split(key, 4)

    # Small shapes consistent with the module's (batch, in_dims) -> (batch, 1).
    batch, in_dims = 8, 32

    # nn.Linear-style init: U(-1/sqrt(in_dims), 1/sqrt(in_dims)).
    bound = 1.0 / (in_dims ** 0.5)
    weight = jax.random.uniform(k_w, (1, in_dims), jnp.float32, -bound, bound)
    bias = jax.random.uniform(k_b, (1,), jnp.float32, -bound, bound)

    x = jax.random.normal(k_x, (batch, in_dims), jnp.float32)

    out = jax.block_until_ready(linear_svm_forward(x, weight, bias))
    ref = x @ weight.T + bias
    assert out.shape == (batch, 1)
    assert jnp.allclose(out, ref, atol=1e-5, rtol=1e-5)

    # Second check exercising the multi-block batch-tiled path.
    batch2, in_dims2 = 1024, 256
    bound2 = 1.0 / (in_dims2 ** 0.5)
    weight2 = jax.random.uniform(k_w, (1, in_dims2), jnp.float32, -bound2, bound2)
    bias2 = jax.random.uniform(k_b, (1,), jnp.float32, -bound2, bound2)
    x2 = jax.random.normal(k_x2, (batch2, in_dims2), jnp.float32)

    out2 = jax.block_until_ready(linear_svm_forward(x2, weight2, bias2))
    ref2 = x2 @ weight2.T + bias2
    assert out2.shape == (batch2, 1)
    assert jnp.allclose(out2, ref2, atol=1e-4, rtol=1e-4)

    print("KERNEL_OK")
</pallas_src>

<mosaic_0001>
module attributes {stable_mosaic.version = 11 : i64} {
  func.func @_linear_svm_kernel(%arg0: i32, %arg1: memref<8x32xf32, #tpu.memory_space<vmem>>, %arg2: memref<1x32xf32, #tpu.memory_space<vmem>>, %arg3: memref<1x1xf32, #tpu.memory_space<smem>>, %arg4: memref<8x1xf32, #tpu.memory_space<vmem>>) attributes {dimension_semantics = [#tpu.dimension_semantics<parallel>], iteration_bounds = array<i64: 1>, scalar_prefetch = 0 : i64, scratch_operands = 0 : i64, tpu.core_type = #tpu.core_type<tc>, window_params = [{transform_indices = @transform_0, window_bounds = array<i64: 8, 32>}, {pipeline_mode = #tpu.pipeline_mode<synchronous>, transform_indices = @transform_1, window_bounds = array<i64: 1, 32>}, {transform_indices = @transform_2, window_bounds = array<i64: 1, 1>}, {transform_indices = @transform_3, window_bounds = array<i64: 8, 1>}]} {
    %c0 = arith.constant 0 : index
    %c0_0 = arith.constant 0 : index
    %0 = vector.load %arg1[%c0, %c0_0] : memref<8x32xf32, #tpu.memory_space<vmem>>, vector<8x32xf32>
    %c0_1 = arith.constant 0 : index
    %c0_2 = arith.constant 0 : index
    %1 = vector.load %arg2[%c0_1, %c0_2] : memref<1x32xf32, #tpu.memory_space<vmem>>, vector<1x32xf32>
    %2 = vector.broadcast %1 : vector<1x32xf32> to vector<8x32xf32>
    %3 = arith.mulf %0, %2 : vector<8x32xf32>
    %cst = arith.constant dense<0.000000e+00> : vector<8xf32>
    %4 = vector.multi_reduction <add>, %3, %cst [1] : vector<8x32xf32> to vector<8xf32>
    %5 = vector.shape_cast %4 : vector<8xf32> to vector<8x1xf32>
    %c0_3 = arith.constant 0 : index
    %c0_4 = arith.constant 0 : index
    %6 = memref.load %arg3[%c0_3, %c0_4] : memref<1x1xf32, #tpu.memory_space<smem>>
    %7 = vector.broadcast %6 : f32 to vector<8x1xf32>
    %8 = arith.addf %5, %7 : vector<8x1xf32>
    %c0_5 = arith.constant 0 : index
    %c0_6 = arith.constant 0 : index
    %9 = vector.load %arg4[%c0_5, %c0_6] : memref<8x1xf32, #tpu.memory_space<vmem>>, vector<8x1xf32>
    tpu.vector_store %arg4[%c0_5, %c0_6], %8 {strides = array<i32>} : memref<8x1xf32, #tpu.memory_space<vmem>>, vector<8x1xf32>,
    return
  }
  func.func @transform_0(%arg0: i32) -> (i32, i32) {
    %c0_i32 = arith.constant 0 : i32
    %c0_i32_0 = arith.constant 0 : i32
    return %arg0, %c0_i32 : i32, i32
  }
  func.func @transform_1(%arg0: i32) -> (i32, i32) {
    %c0_i32 = arith.constant 0 : i32
    %c0_i32_0 = arith.constant 0 : i32
    %c0_i32_1 = arith.constant 0 : i32
    return %c0_i32, %c0_i32_0 : i32, i32
  }
  func.func @transform_2(%arg0: i32) -> (i32, i32) {
    %c0_i32 = arith.constant 0 : i32
    %c0_i32_0 = arith.constant 0 : i32
    %c0_i32_1 = arith.constant 0 : i32
    return %c0_i32, %c0_i32_0 : i32, i32
  }
  func.func @transform_3(%arg0: i32) -> (i32, i32) {
    %c0_i32 = arith.constant 0 : i32
    %c0_i32_0 = arith.constant 0 : i32
    return %arg0, %c0_i32 : i32, i32
  }
}

</mosaic_0001>

<llo_original>
// kernel: tpu_custom_call.1
$region0: #{tpu_custom_call.1}
  #allocation0 [shape = 'u32[]', space=smem, size = 0x4, offset = 0x4, fixed_abs, tag = 'smem constant byte address 0x4 - core index']
  #allocation1 [shape = 'u32[72,128]{1,0:T(1,128)}', space=vmem, size = 0x9000, scoped, tag = 'internal scratch']
  #allocation2 [shape = 'f32[1,1]{1,0:T(1,128)S(6)}', space=smem, size = 0x200, scoped, tag = 'scoped memory for tpu_custom_call.1']
  %s0 = inlined_call_operand.hbm [shape: f32[8,32], index: 0, kind: input, shape index: {}]
  %s1 = inlined_call_operand.vmem [shape: f32[1,32], index: 1, kind: input, shape index: {}]
  %s2 = inlined_call_operand.<no memory space> [shape: f32[1,1], index: 2, kind: input, shape index: {}]
  %s3 = inlined_call_operand.vmem [shape: f32[8,1], index: 3, kind: output, shape index: {}]
  %s4 = sld [smem:[#allocation0]]
  $region26: #{tpu_custom_call.1} parent=0
    _
  %s6 = ssub.s32 1, %s4
  %s7 = scalar_select 0, %s6, %s4
  %8 = sst [smem:[#allocation2]] %s2
  $region1: #{tpu_custom_call.1} parent=0
    #allocation3 [shape = 'u8[4096]{0}', space=vmem, size = 0x1000, scoped, tag = 'input window, operand 0, single buffered']
    #allocation4 [shape = 's32[1]{0}', space=sflag, size = 0x4, scoped, tag = 'scoped memory for tpu_custom_call.1']
    %9 = vsyncpa [#allocation4], 0
    // Predicated region
    $region2: #{tpu_custom_call.1} parent=1 // pred_check
      _
    $region3: #{tpu_custom_call.1} parent=1 // pred_check_branch
      %11 = sbr.rel (0) target = $region5
    $region4: #{tpu_custom_call.1} parent=1 // pred_region
      %13 = vsyncadd [#allocation4], 0
      %s15 = sshll.u32 %s0, 4
      %s16 = int_to_ptr.hbm [resolvable:$true] %s15
      %s17 = sshll.u32 [#allocation3], 4
      %s18 = int_to_ptr.vmem [resolvable:$true] %s17
      %20 = dma.hbm_to_vmem [thread:$0]  %s16, 128, %s18, [#allocation4]
    $region5: #{tpu_custom_call.1} parent=1 // pred_fallthru
      _
    // Predicated region
    $region6: #{tpu_custom_call.1} parent=1 // pred_check
      _
    $region7: #{tpu_custom_call.1} parent=1 // pred_check_branch
      %22 = sbr.rel (0) target = $region9
    $region8: #{tpu_custom_call.1} parent=1 // pred_region
      _
    $region9: #{tpu_custom_call.1} parent=1 // pred_fallthru
      _
    // Predicated region
    $region10: #{tpu_custom_call.1} parent=1 // pred_check
      _
    $region11: #{tpu_custom_call.1} parent=1 // pred_check_branch
      %24 = sbr.rel (0) target = $region13
    $region12: #{tpu_custom_call.1} parent=1 // pred_region
      _
    $region13: #{tpu_custom_call.1} parent=1 // pred_fallthru
      _
    // Predicated region
    $region14: #{tpu_custom_call.1} parent=1 // pred_check
      _
    $region15: #{tpu_custom_call.1} parent=1 // pred_check_branch
      %26 = sbr.rel (0) target = $region17
    $region16: #{tpu_custom_call.1} parent=1 // pred_region
      %28 = dma.done [#allocation4], 128
    $region17: #{tpu_custom_call.1} parent=1 // pred_fallthru
      _
    %v29 = vld [vmem:[#allocation3] sm:$0xff]
    %v30 = vld [vmem:[%s1] sm:$0x1]
    %v32 = vperm.slane %v30, 0
    %v34 = vmul.f32 %v29, %v32
    %vm35 = vcmask 261120
    %v36 = vsel %vm35, %v34, 0.0
    %37 = vadd.xlane.f32.xlu0 %v36
    %v38 = vpop.xlane.xlu0 %37
    %s39 = sld [smem:[#allocation2]]
    %v40 = vstv %s39
    %v41 = vadd.f32 %v38, %v40
    %vm42 = vcmask 7168
    %43 = vst.msk [vmem:[%s3] sm:$0xff] %vm42, %v41
    // Predicated region
    $region18: #{tpu_custom_call.1} parent=1 // pred_check
      _
    $region19: #{tpu_custom_call.1} parent=1 // pred_check_branch
      %45 = sbr.rel (0) target = $region21
    $region20: #{tpu_custom_call.1} parent=1 // pred_region
      _
    $region21: #{tpu_custom_call.1} parent=1 // pred_fallthru
      _
    // Predicated region
    $region22: #{tpu_custom_call.1} parent=1 // pred_check
      _
    $region23: #{tpu_custom_call.1} parent=1 // pred_check_branch
      %47 = sbr.rel (0) target = $region25
    $region24: #{tpu_custom_call.1} parent=1 // pred_region
      _
    $region25: #{tpu_custom_call.1} parent=1 // pred_fallthru
      _
    %48 = vsyncpa [#allocation4], 1

</llo_original>
